<compile_context>
chip_gen: v6e
topology: v6e:2x2x1
jax: 0.10.0
libtpu: 0.0.40
codegen_flags: <defaults>
</compile_context>

<pallas_src>
import functools

import jax
import jax.numpy as jnp
from jax.experimental import pallas as pl
from jax.experimental.pallas import tpu as pltpu

N_SECTORS = 3
INTER_SECT = (0,)   # `auxVar = [0]` in the reference script (DemCurve.interSect)
LANE = 128
TILE_B_MAX = 2048   # sized against v7x's 64 MiB VMEM; tiny operands anyway


def _round_up(x, m):
    return ((x + m - 1) // m) * m


def _price_leontief_kernel(x_ref, p_ref, a_ref, at_ref, bias_ref,
                           w1_ref, b1_ref, w2_ref, b2_ref, w3_ref, b3_ref,
                           out_ref, *, inter_sect):
    n = a_ref.shape[0]
    x = x_ref[...]            # (n, tb)   batch on lanes
    p = p_ref[...]            # (n, tb)
    A = a_ref[...]            # (n, n)
    At = at_ref[...]          # (n, n)    A^T, precomputed in wrapper
    bias = bias_ref[...]      # (n, 1)    A^T @ deltaE, precomputed in wrapper
    tb = x.shape[1]

    # --- DemCurve: one tiny MLP (1->20->10->1, ReLU) per intersected sector ---
    # Layers with a 1-wide contraction/output run on the VPU (broadcast / reduce);
    # only the 20x10 middle layer uses the MXU.
    p_adj = p
    if len(inter_sect) > 0:
        row_ids = jax.lax.broadcasted_iota(jnp.int32, (n, tb), 0)
        for k, idx in enumerate(inter_sect):            # static trace-time loop
            pin = p[idx:idx + 1, :]                                     # (1, tb)
            h1 = jnp.maximum(w1_ref[k] * pin + b1_ref[k], 0.0)          # (20, tb)
            h2 = jnp.maximum(
                jnp.dot(w2_ref[k], h1, preferred_element_type=jnp.float32)
                + b2_ref[k], 0.0)                                       # (10, tb)
            y = jnp.sum(w3_ref[k] * h2, axis=0, keepdims=True) + b3_ref[k]  # (1, tb)
            # one-hot interMatrix scatter -> lane select on row `idx`
            p_adj = jnp.where(row_ids == idx, p_adj + y, p_adj)

    # dCurve(p) = 1.42 / (exp(10*(p/0.4 - 1)) + 1) == 1.42 * sigmoid(10 - 25 p)
    demand = 1.42 * jax.nn.sigmoid(10.0 - 25.0 * p_adj)

    top = jnp.dot(A, x, preferred_element_type=jnp.float32) + demand    # (n, tb)
    bot = jnp.dot(At, p, preferred_element_type=jnp.float32) + bias     # (n, tb)

    out_ref[0:n, :] = top
    out_ref[n:2 * n, :] = bot


def price_leontief_forward(z, A, deltaE, mlp_params):
    """z: (bsz, 2n, 1), A: (1, n, n), deltaE: (1, n, 1)  ->  (bsz, 2n, 1)."""
    bsz = z.shape[0]
    n = N_SECTORS
    K = len(INTER_SECT)

    # transpose so batch sits on the lane (last) axis
    zt = jnp.transpose(z[:, :, 0]).astype(jnp.float32)     # (2n, bsz)
    x2d = zt[:n, :]                                         # (n, bsz)
    p2d = zt[n:, :]                                         # (n, bsz)

    A2d = A.reshape(n, n).astype(jnp.float32)               # (n, n)
    At2d = A2d.T                                            # (n, n)
    dE = deltaE.reshape(n, 1).astype(jnp.float32)           # (n, 1)
    bias = At2d @ dE                                        # (n, 1) = A^T deltaE (batch-invariant)

    w1, b1, w2, b2, w3, b3 = mlp_params
    # weights pre-transposed so the kernel never transposes on the XLU
    w1t = jnp.transpose(w1, (0, 2, 1)).astype(jnp.float32)  # (K, 20, 1)
    b1t = jnp.transpose(b1, (0, 2, 1)).astype(jnp.float32)  # (K, 20, 1)
    w2t = jnp.transpose(w2, (0, 2, 1)).astype(jnp.float32)  # (K, 10, 20)
    b2t = jnp.transpose(b2, (0, 2, 1)).astype(jnp.float32)  # (K, 10, 1)
    w3t = w3.astype(jnp.float32)                            # (K, 10, 1)
    b3t = jnp.transpose(b3, (0, 2, 1)).astype(jnp.float32)  # (K, 1, 1)

    # pad batch to a lane-aligned tile; grid over batch tiles
    tile_b = min(TILE_B_MAX, _round_up(max(bsz, 1), LANE))
    padded = _round_up(bsz, tile_b)
    if padded != bsz:
        pad = padded - bsz
        x2d = jnp.pad(x2d, ((0, 0), (0, pad)))
        p2d = jnp.pad(p2d, ((0, 0), (0, pad)))
    grid = (padded // tile_b,)

    batch_spec = pl.BlockSpec((n, tile_b), lambda i: (0, i))
    const2 = lambda shape: pl.BlockSpec(shape, lambda i: (0, 0))
    const3 = lambda shape: pl.BlockSpec(shape, lambda i: (0, 0, 0))

    kernel = functools.partial(_price_leontief_kernel, inter_sect=INTER_SECT)

    out = pl.pallas_call(
        kernel,
        out_shape=jax.ShapeDtypeStruct((2 * n, padded), jnp.float32),
        grid=grid,
        in_specs=[
            batch_spec, batch_spec,                     # x, p  (tiled over batch)
            const2((n, n)), const2((n, n)),             # A, A^T (VMEM-resident)
            const2((n, 1)),                             # A^T deltaE
            const3((K, 20, 1)), const3((K, 20, 1)),     # w1^T, b1^T
            const3((K, 10, 20)), const3((K, 10, 1)),    # w2^T, b2^T
            const3((K, 10, 1)), const3((K, 1, 1)),      # w3,   b3^T
        ],
        out_specs=pl.BlockSpec((2 * n, tile_b), lambda i: (0, i)),
        compiler_params=pltpu.CompilerParams(dimension_semantics=("parallel",)),
    )(x2d, p2d, A2d, At2d, bias, w1t, b1t, w2t, b2t, w3t, b3t)

    # single lane-dense slab -> (bsz, 2n, 1) like torch.cat((top, bot), dim=1)
    out = out[:, :bsz]                                   # (2n, bsz)
    return jnp.transpose(out)[:, :, None]                # (bsz, 2n, 1)


def _ref_forward(z, A, deltaE, mlp_params):
    """Pure-JAX reference matching the PyTorch forward exactly (f32)."""
    n = N_SECTORS
    K = len(INTER_SECT)
    M = jnp.zeros((n, K), dtype=jnp.float32)
    for k, idx in enumerate(INTER_SECT):
        M = M.at[idx, k].set(1.0)

    x = z[:, :n, :]
    p = z[:, n:, :]
    w1, b1, w2, b2, w3, b3 = mlp_params
    cols = []
    for k, idx in enumerate(INTER_SECT):
        pin = p[:, idx, 0][:, None]                        # (bsz, 1)
        h1 = jax.nn.relu(pin @ w1[k] + b1[k])
        h2 = jax.nn.relu(h1 @ w2[k] + b2[k])
        cols.append(h2 @ w3[k] + b3[k])
    int_vec = jnp.concatenate(cols, axis=1)                # (bsz, K)
    p_adj = p + jnp.matmul(M, int_vec[:, :, None])         # (bsz, n, 1)
    demand = 1.42 / (jnp.exp(10.0 * (p_adj / 0.4 - 1.0)) + 1.0)
    At = jnp.swapaxes(A, 1, 2)
    top = jnp.matmul(A, x) + demand
    bot = jnp.matmul(At, p) + jnp.matmul(At, deltaE)
    return jnp.concatenate([top, bot], axis=1)


if __name__ == "__main__":
    key = jax.random.PRNGKey(0)
    keys = jax.random.split(key, 7)
    bsz, n = 2, N_SECTORS
    K = len(INTER_SECT)

    # Leontief matrix from the reference script (batch-broadcast like PyTorch).
    A = jnp.array([[[0.0, 0.1, 0.0],
                    [0.5, 0.0, 0.0],
                    [0.1, 0.2, 0.0]]], dtype=jnp.float32)           # (1, n, n)
    deltaE = jnp.zeros((1, n, 1), dtype=jnp.float32)                # as in script
    z = 0.5 * jax.random.uniform(keys[0], (bsz, 2 * n, 1), dtype=jnp.float32)

    # Deterministic MLP parameters (one MLP per entry of INTER_SECT, stacked).
    w1 = 0.1 * jax.random.normal(keys[1], (K, 1, 20), dtype=jnp.float32)
    b1 = 0.1 * jax.random.normal(keys[2], (K, 1, 20), dtype=jnp.float32)
    w2 = 0.1 * jax.random.normal(keys[3], (K, 20, 10), dtype=jnp.float32)
    b2 = 0.1 * jax.random.normal(keys[4], (K, 1, 10), dtype=jnp.float32)
    w3 = 0.1 * jax.random.normal(keys[5], (K, 10, 1), dtype=jnp.float32)
    b3 = 0.1 * jax.random.normal(keys[6], (K, 1, 1), dtype=jnp.float32)
    mlp_params = (w1, b1, w2, b2, w3, b3)

    out = price_leontief_forward(z, A, deltaE, mlp_params)
    out = jax.block_until_ready(out)

    ref = _ref_forward(z, A, deltaE, mlp_params)
    assert out.shape == (bsz, 2 * n, 1), out.shape
    assert jnp.allclose(out, ref, atol=1e-5, rtol=1e-5), jnp.abs(out - ref).max()
    print("KERNEL_OK")
</pallas_src>

<mosaic_0001>
module attributes {stable_mosaic.version = 11 : i64} {
  func.func @_price_leontief_kernel(%arg0: i32, %arg1: memref<3x128xf32, #tpu.memory_space<vmem>>, %arg2: memref<3x128xf32, #tpu.memory_space<vmem>>, %arg3: memref<3x3xf32, #tpu.memory_space<vmem>>, %arg4: memref<3x3xf32, #tpu.memory_space<vmem>>, %arg5: memref<3x1xf32, #tpu.memory_space<vmem>>, %arg6: memref<1x20x1xf32, #tpu.memory_space<vmem>>, %arg7: memref<1x20x1xf32, #tpu.memory_space<vmem>>, %arg8: memref<1x10x20xf32, #tpu.memory_space<vmem>>, %arg9: memref<1x10x1xf32, #tpu.memory_space<vmem>>, %arg10: memref<1x10x1xf32, #tpu.memory_space<vmem>>, %arg11: memref<1x1x1xf32, #tpu.memory_space<vmem>>, %arg12: memref<6x128xf32, #tpu.memory_space<vmem>>) attributes {dimension_semantics = [#tpu.dimension_semantics<parallel>], iteration_bounds = array<i64: 1>, scalar_prefetch = 0 : i64, scratch_operands = 0 : i64, tpu.core_type = #tpu.core_type<tc>, window_params = [{transform_indices = @transform_0, window_bounds = array<i64: 3, 128>}, {transform_indices = @transform_1, window_bounds = array<i64: 3, 128>}, {pipeline_mode = #tpu.pipeline_mode<synchronous>, transform_indices = @transform_2, window_bounds = array<i64: 3, 3>}, {pipeline_mode = #tpu.pipeline_mode<synchronous>, transform_indices = @transform_3, window_bounds = array<i64: 3, 3>}, {pipeline_mode = #tpu.pipeline_mode<synchronous>, transform_indices = @transform_4, window_bounds = array<i64: 3, 1>}, {pipeline_mode = #tpu.pipeline_mode<synchronous>, transform_indices = @transform_5, window_bounds = array<i64: 1, 20, 1>}, {pipeline_mode = #tpu.pipeline_mode<synchronous>, transform_indices = @transform_6, window_bounds = array<i64: 1, 20, 1>}, {pipeline_mode = #tpu.pipeline_mode<synchronous>, transform_indices = @transform_7, window_bounds = array<i64: 1, 10, 20>}, {pipeline_mode = #tpu.pipeline_mode<synchronous>, transform_indices = @transform_8, window_bounds = array<i64: 1, 10, 1>}, {pipeline_mode = #tpu.pipeline_mode<synchronous>, transform_indices = @transform_9, window_bounds = array<i64: 1, 10, 1>}, {pipeline_mode = #tpu.pipeline_mode<synchronous>, transform_indices = @transform_10, window_bounds = array<i64: 1, 1, 1>}, {transform_indices = @transform_11, window_bounds = array<i64: 6, 128>}]} {
    %c0 = arith.constant 0 : index
    %c0_0 = arith.constant 0 : index
    %0 = vector.load %arg1[%c0, %c0_0] : memref<3x128xf32, #tpu.memory_space<vmem>>, vector<3x128xf32>
    %c0_1 = arith.constant 0 : index
    %c0_2 = arith.constant 0 : index
    %1 = vector.load %arg2[%c0_1, %c0_2] : memref<3x128xf32, #tpu.memory_space<vmem>>, vector<3x128xf32>
    %c0_3 = arith.constant 0 : index
    %c0_4 = arith.constant 0 : index
    %2 = vector.load %arg3[%c0_3, %c0_4] : memref<3x3xf32, #tpu.memory_space<vmem>>, vector<3x3xf32>
    %c0_5 = arith.constant 0 : index
    %c0_6 = arith.constant 0 : index
    %3 = vector.load %arg4[%c0_5, %c0_6] : memref<3x3xf32, #tpu.memory_space<vmem>>, vector<3x3xf32>
    %c0_7 = arith.constant 0 : index
    %c0_8 = arith.constant 0 : index
    %4 = vector.load %arg5[%c0_7, %c0_8] : memref<3x1xf32, #tpu.memory_space<vmem>>, vector<3x1xf32>
    %5 = tpu.iota {dimensions = array<i32: 0>} : vector<3x128xi32>
    %6 = vector.extract_strided_slice %1 {offsets = [0, 0], sizes = [1, 128], strides = [1, 1]} : vector<3x128xf32> to vector<1x128xf32>
    %c0_9 = arith.constant 0 : index
    %c0_10 = arith.constant 0 : index
    %c0_11 = arith.constant 0 : index
    %7 = vector.load %arg6[%c0_9, %c0_10, %c0_11] : memref<1x20x1xf32, #tpu.memory_space<vmem>>, vector<1x20x1xf32>
    %8 = vector.shape_cast %7 : vector<1x20x1xf32> to vector<20x1xf32>
    %9 = vector.broadcast %8 : vector<20x1xf32> to vector<20x128xf32>
    %10 = vector.broadcast %6 : vector<1x128xf32> to vector<20x128xf32>
    %11 = arith.mulf %9, %10 : vector<20x128xf32>
    %c0_12 = arith.constant 0 : index
    %c0_13 = arith.constant 0 : index
    %c0_14 = arith.constant 0 : index
    %12 = vector.load %arg7[%c0_12, %c0_13, %c0_14] : memref<1x20x1xf32, #tpu.memory_space<vmem>>, vector<1x20x1xf32>
    %13 = vector.shape_cast %12 : vector<1x20x1xf32> to vector<20x1xf32>
    %14 = vector.broadcast %13 : vector<20x1xf32> to vector<20x128xf32>
    %15 = arith.addf %11, %14 : vector<20x128xf32>
    %cst = arith.constant 0.000000e+00 : f32
    %16 = vector.broadcast %cst : f32 to vector<20x128xf32>
    %17 = arith.maximumf %15, %16 : vector<20x128xf32>
    %c0_15 = arith.constant 0 : index
    %c0_16 = arith.constant 0 : index
    %c0_17 = arith.constant 0 : index
    %18 = vector.load %arg8[%c0_15, %c0_16, %c0_17] : memref<1x10x20xf32, #tpu.memory_space<vmem>>, vector<1x10x20xf32>
    %19 = vector.shape_cast %18 : vector<1x10x20xf32> to vector<10x20xf32>
    %cst_18 = arith.constant dense<0.000000e+00> : vector<10x128xf32>
    %20 = tpu.matmul %19, %17, %cst_18 {dimension_numbers = #tpu.dot_dimension_numbers<[1], [0], [0], [1], [0, 0, 1, 1], [], []>} : vector<10x20xf32>, vector<20x128xf32>, vector<10x128xf32> -> vector<10x128xf32>
    %c0_19 = arith.constant 0 : index
    %c0_20 = arith.constant 0 : index
    %c0_21 = arith.constant 0 : index
    %21 = vector.load %arg9[%c0_19, %c0_20, %c0_21] : memref<1x10x1xf32, #tpu.memory_space<vmem>>, vector<1x10x1xf32>
    %22 = vector.shape_cast %21 : vector<1x10x1xf32> to vector<10x1xf32>
    %23 = vector.broadcast %22 : vector<10x1xf32> to vector<10x128xf32>
    %24 = arith.addf %20, %23 : vector<10x128xf32>
    %cst_22 = arith.constant 0.000000e+00 : f32
    %25 = vector.broadcast %cst_22 : f32 to vector<10x128xf32>
    %26 = arith.maximumf %24, %25 : vector<10x128xf32>
    %c0_23 = arith.constant 0 : index
    %c0_24 = arith.constant 0 : index
    %c0_25 = arith.constant 0 : index
    %27 = vector.load %arg10[%c0_23, %c0_24, %c0_25] : memref<1x10x1xf32, #tpu.memory_space<vmem>>, vector<1x10x1xf32>
    %28 = vector.shape_cast %27 : vector<1x10x1xf32> to vector<10x1xf32>
    %29 = vector.broadcast %28 : vector<10x1xf32> to vector<10x128xf32>
    %30 = arith.mulf %29, %26 : vector<10x128xf32>
    %cst_26 = arith.constant dense<0.000000e+00> : vector<128xf32>
    %31 = vector.multi_reduction <add>, %30, %cst_26 [0] : vector<10x128xf32> to vector<128xf32>
    %32 = vector.shape_cast %31 : vector<128xf32> to vector<1x128xf32>
    %c0_27 = arith.constant 0 : index
    %c0_28 = arith.constant 0 : index
    %c0_29 = arith.constant 0 : index
    %33 = vector.load %arg11[%c0_27, %c0_28, %c0_29] : memref<1x1x1xf32, #tpu.memory_space<vmem>>, vector<1x1x1xf32>
    %34 = vector.shape_cast %33 : vector<1x1x1xf32> to vector<1x1xf32>
    %35 = vector.broadcast %34 : vector<1x1xf32> to vector<1x128xf32>
    %36 = arith.addf %32, %35 : vector<1x128xf32>
    %c0_i32 = arith.constant 0 : i32
    %37 = vector.broadcast %c0_i32 : i32 to vector<3x128xi32>
    %38 = arith.cmpi eq, %5, %37 : vector<3x128xi32>
    %39 = vector.broadcast %36 : vector<1x128xf32> to vector<3x128xf32>
    %40 = arith.addf %1, %39 : vector<3x128xf32>
    %41 = arith.select %38, %40, %1 : vector<3x128xi1>, vector<3x128xf32>
    %cst_30 = arith.constant 2.500000e+01 : f32
    %42 = vector.broadcast %cst_30 : f32 to vector<3x128xf32>
    %43 = arith.mulf %42, %41 : vector<3x128xf32>
    %cst_31 = arith.constant 1.000000e+01 : f32
    %44 = vector.broadcast %cst_31 : f32 to vector<3x128xf32>
    %45 = arith.subf %44, %43 : vector<3x128xf32>
    %46 = arith.negf %45 : vector<3x128xf32>
    %47 = math.exp %46 : vector<3x128xf32>
    %cst_32 = arith.constant 1.000000e+00 : f32
    %48 = vector.broadcast %cst_32 : f32 to vector<3x128xf32>
    %49 = arith.addf %48, %47 : vector<3x128xf32>
    %50 = arith.divf %48, %49 : vector<3x128xf32>
    %cst_33 = arith.constant 1.420000e+00 : f32
    %51 = vector.broadcast %cst_33 : f32 to vector<3x128xf32>
    %52 = arith.mulf %51, %50 : vector<3x128xf32>
    %cst_34 = arith.constant dense<0.000000e+00> : vector<3x128xf32>
    %53 = tpu.matmul %2, %0, %cst_34 {dimension_numbers = #tpu.dot_dimension_numbers<[1], [0], [0], [1], [0, 0, 1, 1], [], []>} : vector<3x3xf32>, vector<3x128xf32>, vector<3x128xf32> -> vector<3x128xf32>
    %54 = arith.addf %53, %52 : vector<3x128xf32>
    %cst_35 = arith.constant dense<0.000000e+00> : vector<3x128xf32>
    %55 = tpu.matmul %3, %1, %cst_35 {dimension_numbers = #tpu.dot_dimension_numbers<[1], [0], [0], [1], [0, 0, 1, 1], [], []>} : vector<3x3xf32>, vector<3x128xf32>, vector<3x128xf32> -> vector<3x128xf32>
    %56 = vector.broadcast %4 : vector<3x1xf32> to vector<3x128xf32>
    %57 = arith.addf %55, %56 : vector<3x128xf32>
    %c0_36 = arith.constant 0 : index
    %c0_37 = arith.constant 0 : index
    %58 = vector.load %arg12[%c0_36, %c0_37] : memref<6x128xf32, #tpu.memory_space<vmem>>, vector<3x128xf32>
    tpu.vector_store %arg12[%c0_36, %c0_37], %54 {strides = array<i32>} : memref<6x128xf32, #tpu.memory_space<vmem>>, vector<3x128xf32>,
    %c3 = arith.constant 3 : index
    %c0_38 = arith.constant 0 : index
    %59 = vector.load %arg12[%c3, %c0_38] : memref<6x128xf32, #tpu.memory_space<vmem>>, vector<3x128xf32>
    tpu.vector_store %arg12[%c3, %c0_38], %57 {strides = array<i32>} : memref<6x128xf32, #tpu.memory_space<vmem>>, vector<3x128xf32>,
    return
  }
  func.func @transform_0(%arg0: i32) -> (i32, i32) {
    %c0_i32 = arith.constant 0 : i32
    %c0_i32_0 = arith.constant 0 : i32
    return %c0_i32, %arg0 : i32, i32
  }
  func.func @transform_1(%arg0: i32) -> (i32, i32) {
    %c0_i32 = arith.constant 0 : i32
    %c0_i32_0 = arith.constant 0 : i32
    return %c0_i32, %arg0 : i32, i32
  }
  func.func @transform_2(%arg0: i32) -> (i32, i32) {
    %c0_i32 = arith.constant 0 : i32
    %c0_i32_0 = arith.constant 0 : i32
    %c0_i32_1 = arith.constant 0 : i32
    return %c0_i32, %c0_i32_0 : i32, i32
  }
  func.func @transform_3(%arg0: i32) -> (i32, i32) {
    %c0_i32 = arith.constant 0 : i32
    %c0_i32_0 = arith.constant 0 : i32
    %c0_i32_1 = arith.constant 0 : i32
    return %c0_i32, %c0_i32_0 : i32, i32
  }
  func.func @transform_4(%arg0: i32) -> (i32, i32) {
    %c0_i32 = arith.constant 0 : i32
    %c0_i32_0 = arith.constant 0 : i32
    %c0_i32_1 = arith.constant 0 : i32
    return %c0_i32, %c0_i32_0 : i32, i32
  }
  func.func @transform_5(%arg0: i32) -> (i32, i32, i32) {
    %c0_i32 = arith.constant 0 : i32
    %c0_i32_0 = arith.constant 0 : i32
    %c0_i32_1 = arith.constant 0 : i32
    %c0_i32_2 = arith.constant 0 : i32
    return %c0_i32, %c0_i32_0, %c0_i32_1 : i32, i32, i32
  }
  func.func @transform_6(%arg0: i32) -> (i32, i32, i32) {
    %c0_i32 = arith.constant 0 : i32
    %c0_i32_0 = arith.constant 0 : i32
    %c0_i32_1 = arith.constant 0 : i32
    %c0_i32_2 = arith.constant 0 : i32
    return %c0_i32, %c0_i32_0, %c0_i32_1 : i32, i32, i32
  }
  func.func @transform_7(%arg0: i32) -> (i32, i32, i32) {
    %c0_i32 = arith.constant 0 : i32
    %c0_i32_0 = arith.constant 0 : i32
    %c0_i32_1 = arith.constant 0 : i32
    %c0_i32_2 = arith.constant 0 : i32
    return %c0_i32, %c0_i32_0, %c0_i32_1 : i32, i32, i32
  }
  func.func @transform_8(%arg0: i32) -> (i32, i32, i32) {
    %c0_i32 = arith.constant 0 : i32
    %c0_i32_0 = arith.constant 0 : i32
    %c0_i32_1 = arith.constant 0 : i32
    %c0_i32_2 = arith.constant 0 : i32
    return %c0_i32, %c0_i32_0, %c0_i32_1 : i32, i32, i32
  }
  func.func @transform_9(%arg0: i32) -> (i32, i32, i32) {
    %c0_i32 = arith.constant 0 : i32
    %c0_i32_0 = arith.constant 0 : i32
    %c0_i32_1 = arith.constant 0 : i32
    %c0_i32_2 = arith.constant 0 : i32
    return %c0_i32, %c0_i32_0, %c0_i32_1 : i32, i32, i32
  }
  func.func @transform_10(%arg0: i32) -> (i32, i32, i32) {
    %c0_i32 = arith.constant 0 : i32
    %c0_i32_0 = arith.constant 0 : i32
    %c0_i32_1 = arith.constant 0 : i32
    %c0_i32_2 = arith.constant 0 : i32
    return %c0_i32, %c0_i32_0, %c0_i32_1 : i32, i32, i32
  }
  func.func @transform_11(%arg0: i32) -> (i32, i32) {
    %c0_i32 = arith.constant 0 : i32
    %c0_i32_0 = arith.constant 0 : i32
    return %c0_i32, %arg0 : i32, i32
  }
}

</mosaic_0001>

<llo_original>
// kernel: tpu_custom_call.1
$region0: #{tpu_custom_call.1}
  #allocation0 [shape = 'u32[]', space=smem, size = 0x4, offset = 0x4, fixed_abs, tag = 'smem constant byte address 0x4 - core index']
  #allocation1 [shape = 'u32[144,128]{1,0:T(1,128)}', space=vmem, size = 0x12000, scoped, tag = 'internal scratch']
  #allocation2 [shape = 'f32[1,1,1]{2,1,0:T(1,128)S(1)}', space=vmem, size = 0x200, scoped, tag = 'scoped memory for tpu_custom_call.1']
  %s0 = inlined_call_operand.vmem [shape: f32[3,128], index: 0, kind: input, shape index: {}]
  %s1 = inlined_call_operand.vmem [shape: f32[3,128], index: 1, kind: input, shape index: {}]
  %s2 = inlined_call_operand.vmem [shape: f32[3,3], index: 2, kind: input, shape index: {}]
  %s3 = inlined_call_operand.vmem [shape: f32[3,3], index: 3, kind: input, shape index: {}]
  %s4 = inlined_call_operand.vmem [shape: f32[3,1], index: 4, kind: input, shape index: {}]
  %s5 = inlined_call_operand.vmem [shape: f32[1,20,1], index: 5, kind: input, shape index: {}]
  %s6 = inlined_call_operand.vmem [shape: f32[1,20,1], index: 6, kind: input, shape index: {}]
  %s7 = inlined_call_operand.vmem [shape: f32[1,10,20], index: 7, kind: input, shape index: {}]
  %s8 = inlined_call_operand.vmem [shape: f32[1,10,1], index: 8, kind: input, shape index: {}]
  %s9 = inlined_call_operand.vmem [shape: f32[1,10,1], index: 9, kind: input, shape index: {}]
  %s10 = inlined_call_operand.<no memory space> [shape: f32[1,1,1], index: 10, kind: input, shape index: {}]
  %s11 = inlined_call_operand.hbm [shape: f32[6,128], index: 11, kind: output, shape index: {}]
  %s12 = sld [smem:[#allocation0]]
  $region54: #{tpu_custom_call.1} parent=0
    _
  %s14 = ssub.s32 1, %s12
  %s15 = scalar_select 0, %s14, %s12
  %v16 = vstv %s10
  %17 = vst [vmem:[#allocation2] sm:$0x1] %v16
  $region1: #{tpu_custom_call.1} parent=0
    #allocation3 [shape = 'u8[4096]{0}', space=vmem, size = 0x1000, scoped, tag = 'output window, operand 0, single buffered']
    #allocation4 [shape = 's32[1]{0}', space=sflag, size = 0x4, scoped, tag = 'scoped memory for tpu_custom_call.1']
    %18 = vsyncpa [#allocation4], 0
    // Predicated region
    $region2: #{tpu_custom_call.1} parent=1 // pred_check
      _
    $region3: #{tpu_custom_call.1} parent=1 // pred_check_branch
      %20 = sbr.rel (0) target = $region5
    $region4: #{tpu_custom_call.1} parent=1 // pred_region
      _
    $region5: #{tpu_custom_call.1} parent=1 // pred_fallthru
      _
    // Predicated region
    $region6: #{tpu_custom_call.1} parent=1 // pred_check
      _
    $region7: #{tpu_custom_call.1} parent=1 // pred_check_branch
      %22 = sbr.rel (0) target = $region9
    $region8: #{tpu_custom_call.1} parent=1 // pred_region
      _
    $region9: #{tpu_custom_call.1} parent=1 // pred_fallthru
      _
    // Predicated region
    $region10: #{tpu_custom_call.1} parent=1 // pred_check
      _
    $region11: #{tpu_custom_call.1} parent=1 // pred_check_branch
      %24 = sbr.rel (0) target = $region13
    $region12: #{tpu_custom_call.1} parent=1 // pred_region
      _
    $region13: #{tpu_custom_call.1} parent=1 // pred_fallthru
      _
    // Predicated region
    $region14: #{tpu_custom_call.1} parent=1 // pred_check
      _
    $region15: #{tpu_custom_call.1} parent=1 // pred_check_branch
      %26 = sbr.rel (0) target = $region17
    $region16: #{tpu_custom_call.1} parent=1 // pred_region
      _
    $region17: #{tpu_custom_call.1} parent=1 // pred_fallthru
      _
    // Predicated region
    $region18: #{tpu_custom_call.1} parent=1 // pred_check
      _
    $region19: #{tpu_custom_call.1} parent=1 // pred_check_branch
      %28 = sbr.rel (0) target = $region21
    $region20: #{tpu_custom_call.1} parent=1 // pred_region
      _
    $region21: #{tpu_custom_call.1} parent=1 // pred_fallthru
      _
    // Predicated region
    $region22: #{tpu_custom_call.1} parent=1 // pred_check
      _
    $region23: #{tpu_custom_call.1} parent=1 // pred_check_branch
      %30 = sbr.rel (0) target = $region25
    $region24: #{tpu_custom_call.1} parent=1 // pred_region
      _
    $region25: #{tpu_custom_call.1} parent=1 // pred_fallthru
      _
    // Predicated region
    $region26: #{tpu_custom_call.1} parent=1 // pred_check
      _
    $region27: #{tpu_custom_call.1} parent=1 // pred_check_branch
      %32 = sbr.rel (0) target = $region29
    $region28: #{tpu_custom_call.1} parent=1 // pred_region
      _
    $region29: #{tpu_custom_call.1} parent=1 // pred_fallthru
      _
    // Predicated region
    $region30: #{tpu_custom_call.1} parent=1 // pred_check
      _
    $region31: #{tpu_custom_call.1} parent=1 // pred_check_branch
      %34 = sbr.rel (0) target = $region33
    $region32: #{tpu_custom_call.1} parent=1 // pred_region
      _
    $region33: #{tpu_custom_call.1} parent=1 // pred_fallthru
      _
    // Predicated region
    $region34: #{tpu_custom_call.1} parent=1 // pred_check
      _
    $region35: #{tpu_custom_call.1} parent=1 // pred_check_branch
      %36 = sbr.rel (0) target = $region37
    $region36: #{tpu_custom_call.1} parent=1 // pred_region
      _
    $region37: #{tpu_custom_call.1} parent=1 // pred_fallthru
      _
    // Predicated region
    $region38: #{tpu_custom_call.1} parent=1 // pred_check
      _
    $region39: #{tpu_custom_call.1} parent=1 // pred_check_branch
      %38 = sbr.rel (0) target = $region41
    $region40: #{tpu_custom_call.1} parent=1 // pred_region
      _
    $region41: #{tpu_custom_call.1} parent=1 // pred_fallthru
      _
    // Predicated region
    $region42: #{tpu_custom_call.1} parent=1 // pred_check
      _
    $region43: #{tpu_custom_call.1} parent=1 // pred_check_branch
      %40 = sbr.rel (0) target = $region45
    $region44: #{tpu_custom_call.1} parent=1 // pred_region
      _
    $region45: #{tpu_custom_call.1} parent=1 // pred_fallthru
      _
    %v41 = vld [vmem:[%s0] sm:$0x7]
    %v42 = vld [vmem:[%s1] sm:$0x7]
    %v43 = vld [vmem:[%s2] sm:$0x7]
    %v44 = vld [vmem:[%s3] sm:$0x7]
    %v45 = vld [vmem:[%s4] sm:$0x7]
    %v46 = vlaneseq
    %v47 = vshrl.u32 %v46, 7
    %v48 = vld [vmem:[%s5] sm:$0xff]
    %v49 = vld [vmem:[%s5 + $0x8] sm:$0xff]
    %v50 = vld [vmem:[%s5 + $0x10] sm:$0xf]
    %52 = vset.pattern.permute.xlu0 0
    %53 = vperm.xlu0 %52, %v48
    %v54 = vpop.permute.xlu0 %53
    %57 = vset.pattern.permute.xlu0 0
    %58 = vperm.xlu0 %57, %v49
    %v59 = vpop.permute.xlu0 %58
    %62 = vset.pattern.permute.xlu0 0
    %63 = vperm.xlu0 %62, %v50
    %v64 = vpop.permute.xlu0 %63
    %v66 = vlaneseq
    %v67 = vshrl.u32 %v66, 7
    %v68 = vsub.s32 0, %v67
    %v69 = vrot.slane %v42, %v68
    %v70 = vmul.f32 %v54, %v69
    %v71 = vmul.f32 %v59, %v69
    %v72 = vmul.f32 %v64, %v69
    %v73 = vld [vmem:[%s6] sm:$0xff]
    %v74 = vld [vmem:[%s6 + $0x8] sm:$0xff]
    %v75 = vld [vmem:[%s6 + $0x10] sm:$0xf]
    %77 = vset.pattern.permute.xlu0 0
    %78 = vperm.xlu0 %77, %v73
    %v79 = vpop.permute.xlu0 %78
    %82 = vset.pattern.permute.xlu0 0
    %83 = vperm.xlu0 %82, %v74
    %v84 = vpop.permute.xlu0 %83
    %87 = vset.pattern.permute.xlu0 0
    %88 = vperm.xlu0 %87, %v75
    %v89 = vpop.permute.xlu0 %88
    %v91 = vadd.f32 %v70, %v79
    %v92 = vadd.f32 %v71, %v84
    %v93 = vadd.f32 %v72, %v89
    %v94 = vmax.f32 %v91, 0.0
    %v95 = vmax.f32 %v92, 0.0
    %v96 = vmax.f32 %v93, 0.0
    %v97 = vld [vmem:[%s7] sm:$0xff]
    %v98 = vld [vmem:[%s7 + $0x8] sm:$0x3]
    %v99 = vld [vmem:[%s8] sm:$0xff]
    %v100 = vld [vmem:[%s8 + $0x8] sm:$0x3]
    %102 = vset.pattern.permute.xlu0 0
    %103 = vperm.xlu0 %102, %v99
    %v104 = vpop.permute.xlu0 %103
    %107 = vset.pattern.permute.xlu0 0
    %108 = vperm.xlu0 %107, %v100
    %v109 = vpop.permute.xlu0 %108
    %vm111 = vcmask 162816
    %v113 = vsel %vm111, %v97, 0
    %v116 = vsel %vm111, %v98, 0
    %vm118 = vcmask 1043456
    %v120 = vsel %vm118, %v96, 0
    %122 = vmatprep.subr.mxu0 0.0
    %123 = vmatpush1.msra.mxu0 0.0
    %124 = vmatprep.subr.mxu0 0.0
    %125 = vmatpush1.msra.mxu0 0.0
    %126 = vmatprep.subr.mxu0 0.0
    %127 = vmatpush1.msra.mxu0 0.0
    %128 = vmatprep.subr.mxu0 0.0
    %129 = vmatpush1.msra.mxu0 0.0
    %130 = vmatprep.subr.mxu0 0.0
    %131 = vmatpush1.msra.mxu0 0.0
    %132 = vmatprep.subr.mxu0 0.0
    %133 = vmatpush1.msra.mxu0 0.0
    %134 = vmatprep.subr.mxu0 0.0
    %135 = vmatpush1.msra.mxu0 0.0
    %136 = vmatprep.subr.mxu0 0.0
    %137 = vmatpush1.msra.mxu0 0.0
    %138 = vmatprep.subr.mxu0 0.0
    %139 = vmatpush1.msra.mxu0 0.0
    %140 = vmatprep.subr.mxu0 0.0
    %141 = vmatpush1.msra.mxu0 0.0
    %142 = vmatprep.subr.mxu0 0.0
    %143 = vmatpush1.msra.mxu0 0.0
    %144 = vmatprep.subr.mxu0 0.0
    %145 = vmatpush1.msra.mxu0 0.0
    %146 = vmatprep.subr.mxu0 0.0
    %147 = vmatpush1.msra.mxu0 0.0
    %148 = vmatprep.subr.mxu0 0.0
    %149 = vmatpush1.msra.mxu0 %v120
    %150 = vmatprep.subr.mxu0 0.0
    %151 = vmatpush1.msra.mxu0 %v95
    %152 = vmatprep.subr.mxu0 0.0
    %153 = vmatpush1.msra.mxu0 %v94
    %154 = vmatprep.subr.mxu0 0.0
    %155 = vmatpush2.msra.mxu0 0.0
    %156 = vmatprep.subr.mxu0 0.0
    %157 = vmatpush2.msra.mxu0 0.0
    %158 = vmatprep.subr.mxu0 0.0
    %159 = vmatpush2.msra.mxu0 0.0
    %160 = vmatprep.subr.mxu0 0.0
    %161 = vmatpush2.msra.mxu0 0.0
    %162 = vmatprep.subr.mxu0 0.0
    %163 = vmatpush2.msra.mxu0 0.0
    %164 = vmatprep.subr.mxu0 0.0
    %165 = vmatpush2.msra.mxu0 0.0
    %166 = vmatprep.subr.mxu0 0.0
    %167 = vmatpush2.msra.mxu0 0.0
    %168 = vmatprep.subr.mxu0 0.0
    %169 = vmatpush2.msra.mxu0 0.0
    %170 = vmatprep.subr.mxu0 0.0
    %171 = vmatpush2.msra.mxu0 0.0
    %172 = vmatprep.subr.mxu0 0.0
    %173 = vmatpush2.msra.mxu0 0.0
    %174 = vmatprep.subr.mxu0 0.0
    %175 = vmatpush2.msra.mxu0 0.0
    %176 = vmatprep.subr.mxu0 0.0
    %177 = vmatpush2.msra.mxu0 0.0
    %178 = vmatprep.subr.mxu0 0.0
    %179 = vmatpush2.msra.mxu0 0.0
    %180 = vmatprep.subr.mxu0 0.0
    %181 = vmatpush2.msra.mxu0 0.0
    %182 = vmatprep.subr.mxu0 0.0
    %183 = vmatpush2.msra.mxu0 0.0
    %184 = vmatprep.subr.mxu0 0.0
    %185 = vmatpush2.msra.mxu0 0.0
    %186 = vmatprep.mubr.f32.mxu0 0.0
    %187 = vmatmul.mubr.f32.gmra.mxu0 %v113
    %v188 = vpop.f32.mrf.mxu0
    %v189 = vadd.f32 %v104, %v188
    %v190 = vpop.f32.mrf.mxu0
    %191 = vmatprep.mubr.f32.mxu0 0.0
    %192 = vmatmul.mubr.f32.gmra.mxu0 %v116
    %v193 = vpop.f32.mrf.mxu0
    %v194 = vadd.f32 %v109, %v193
    %v195 = vpop.f32.mrf.mxu0
    %196 = vdwg.mxu0
    %v197 = vmax.f32 %v189, 0.0
    %v198 = vmax.f32 %v194, 0.0
    %v199 = vld [vmem:[%s9] sm:$0xff]
    %v200 = vld [vmem:[%s9 + $0x8] sm:$0x3]
    %202 = vset.pattern.permute.xlu0 0
    %203 = vperm.xlu0 %202, %v199
    %v204 = vpop.permute.xlu0 %203
    %207 = vset.pattern.permute.xlu0 0
    %208 = vperm.xlu0 %207, %v200
    %v209 = vpop.permute.xlu0 %208
    %v211 = vmul.f32 %v204, %v197
    %v212 = vmul.f32 %v209, %v198
    %vm213 = vcmask 1041408
    %v214 = vsel %vm213, %v212, 0.0
    %v215 = vadd.f32 %v211, %v214
    %v216 = vrot.slane %v215, 4
    %v217 = vadd.f32 %v215, %v216
    %v218 = vrot.slane %v217, 2
    %v219 = vadd.f32 %v217, %v218
    %v220 = vrot.slane %v219, 1
    %v221 = vadd.f32 %v219, %v220
    %v222 = vld [vmem:[#allocation2] sm:$0x1]
    %224 = vset.pattern.permute.xlu0 0
    %225 = vperm.xlu0 %224, %v222
    %v226 = vpop.permute.xlu0 %225
    %v228 = vlaneseq
    %v229 = vshrl.u32 %v228, 7
    %v230 = vsub.s32 0, %v229
    %v231 = vrot.slane %v226, %v230
    %v232 = vadd.f32 %v221, %v231
    %vm233 = vcmp.eq.s32.totalorder %v47, 0
    %v234 = vadd.f32 %v42, %v232
    %v235 = vsel %vm233, %v234, %v42
    %v236 = vmul.f32 %v235, 25.0
    %v237 = vsub.f32 10.0, %v236
    %v238 = vxor.u32 %v237, 2147483648
    %v239 = vmul.f32 %v238, 1.442695
    %v240 = vpow.pop %v239
    %v241 = vadd.f32 %v240, 1.0
    %v242 = vrcp.pop %v241
    %v243 = vmul.f32 1.0, %v242
    %v244 = vmul.f32 %v243, 1.42
    %vm245 = vcmask 23552
    %v247 = vsel %vm245, %v43, 0
    %vm249 = vcmask 1042432
    %v251 = vsel %vm249, %v41, 0
    %253 = vmatprep.subr.mxu0 0.0
    %254 = vmatpush1.msra.mxu0 0.0
    %255 = vmatprep.subr.mxu0 0.0
    %256 = vmatpush1.msra.mxu0 0.0
    %257 = vmatprep.subr.mxu0 0.0
    %258 = vmatpush1.msra.mxu0 0.0
    %259 = vmatprep.subr.mxu0 0.0
    %260 = vmatpush1.msra.mxu0 0.0
    %261 = vmatprep.subr.mxu0 0.0
    %262 = vmatpush1.msra.mxu0 0.0
    %263 = vmatprep.subr.mxu0 0.0
    %264 = vmatpush1.msra.mxu0 0.0
    %265 = vmatprep.subr.mxu0 0.0
    %266 = vmatpush1.msra.mxu0 0.0
    %267 = vmatprep.subr.mxu0 0.0
    %268 = vmatpush1.msra.mxu0 0.0
    %269 = vmatprep.subr.mxu0 0.0
    %270 = vmatpush1.msra.mxu0 0.0
    %271 = vmatprep.subr.mxu0 0.0
    %272 = vmatpush1.msra.mxu0 0.0
    %273 = vmatprep.subr.mxu0 0.0
    %274 = vmatpush1.msra.mxu0 0.0
    %275 = vmatprep.subr.mxu0 0.0
    %276 = vmatpush1.msra.mxu0 0.0
    %277 = vmatprep.subr.mxu0 0.0
    %278 = vmatpush1.msra.mxu0 0.0
    %279 = vmatprep.subr.mxu0 0.0
    %280 = vmatpush1.msra.mxu0 0.0
    %281 = vmatprep.subr.mxu0 0.0
    %282 = vmatpush1.msra.mxu0 0.0
    %283 = vmatprep.subr.mxu0 0.0
    %284 = vmatpush1.msra.mxu0 %v251
    %285 = vmatprep.subr.mxu0 0.0
    %286 = vmatpush2.msra.mxu0 0.0
    %287 = vmatprep.subr.mxu0 0.0
    %288 = vmatpush2.msra.mxu0 0.0
    %289 = vmatprep.subr.mxu0 0.0
    %290 = vmatpush2.msra.mxu0 0.0
    %291 = vmatprep.subr.mxu0 0.0
    %292 = vmatpush2.msra.mxu0 0.0
    %293 = vmatprep.subr.mxu0 0.0
    %294 = vmatpush2.msra.mxu0 0.0
    %295 = vmatprep.subr.mxu0 0.0
    %296 = vmatpush2.msra.mxu0 0.0
    %297 = vmatprep.subr.mxu0 0.0
    %298 = vmatpush2.msra.mxu0 0.0
    %299 = vmatprep.subr.mxu0 0.0
    %300 = vmatpush2.msra.mxu0 0.0
    %301 = vmatprep.subr.mxu0 0.0
    %302 = vmatpush2.msra.mxu0 0.0
    %303 = vmatprep.subr.mxu0 0.0
    %304 = vmatpush2.msra.mxu0 0.0
    %305 = vmatprep.subr.mxu0 0.0
    %306 = vmatpush2.msra.mxu0 0.0
    %307 = vmatprep.subr.mxu0 0.0
    %308 = vmatpush2.msra.mxu0 0.0
    %309 = vmatprep.subr.mxu0 0.0
    %310 = vmatpush2.msra.mxu0 0.0
    %311 = vmatprep.subr.mxu0 0.0
    %312 = vmatpush2.msra.mxu0 0.0
    %313 = vmatprep.subr.mxu0 0.0
    %314 = vmatpush2.msra.mxu0 0.0
    %315 = vmatprep.subr.mxu0 0.0
    %316 = vmatpush2.msra.mxu0 0.0
    %317 = vmatprep.mubr.f32.mxu0 0.0
    %318 = vmatmul.mubr.f32.gmra.mxu0 %v247
    %v319 = vpop.f32.mrf.mxu0
    %v320 = vadd.f32 %v244, %v319
    %v321 = vpop.f32.mrf.mxu0
    %322 = vdwg.mxu0
    %324 = vset.pattern.permute.xlu0 0
    %325 = vperm.xlu0 %324, %v45
    %v326 = vpop.permute.xlu0 %325
    %v329 = vsel %vm245, %v44, 0
    %v332 = vsel %vm249, %v42, 0
    %334 = vmatprep.subr.mxu0 0.0
    %335 = vmatpush1.msra.mxu0 0.0
    %336 = vmatprep.subr.mxu0 0.0
    %337 = vmatpush1.msra.mxu0 0.0
    %338 = vmatprep.subr.mxu0 0.0
    %339 = vmatpush1.msra.mxu0 0.0
    %340 = vmatprep.subr.mxu0 0.0
    %341 = vmatpush1.msra.mxu0 0.0
    %342 = vmatprep.subr.mxu0 0.0
    %343 = vmatpush1.msra.mxu0 0.0
    %344 = vmatprep.subr.mxu0 0.0
    %345 = vmatpush1.msra.mxu0 0.0
    %346 = vmatprep.subr.mxu0 0.0
    %347 = vmatpush1.msra.mxu0 0.0
    %348 = vmatprep.subr.mxu0 0.0
    %349 = vmatpush1.msra.mxu0 0.0
    %350 = vmatprep.subr.mxu0 0.0
    %351 = vmatpush1.msra.mxu0 0.0
    %352 = vmatprep.subr.mxu0 0.0
    %353 = vmatpush1.msra.mxu0 0.0
    %354 = vmatprep.subr.mxu0 0.0
    %355 = vmatpush1.msra.mxu0 0.0
    %356 = vmatprep.subr.mxu0 0.0
    %357 = vmatpush1.msra.mxu0 0.0
    %358 = vmatprep.subr.mxu0 0.0
    %359 = vmatpush1.msra.mxu0 0.0
    %360 = vmatprep.subr.mxu0 0.0
    %361 = vmatpush1.msra.mxu0 0.0
    %362 = vmatprep.subr.mxu0 0.0
    %363 = vmatpush1.msra.mxu0 0.0
    %364 = vmatprep.subr.mxu0 0.0
    %365 = vmatpush1.msra.mxu0 %v332
    %366 = vmatprep.subr.mxu0 0.0
    %367 = vmatpush2.msra.mxu0 0.0
    %368 = vmatprep.subr.mxu0 0.0
    %369 = vmatpush2.msra.mxu0 0.0
    %370 = vmatprep.subr.mxu0 0.0
    %371 = vmatpush2.msra.mxu0 0.0
    %372 = vmatprep.subr.mxu0 0.0
    %373 = vmatpush2.msra.mxu0 0.0
    %374 = vmatprep.subr.mxu0 0.0
    %375 = vmatpush2.msra.mxu0 0.0
    %376 = vmatprep.subr.mxu0 0.0
    %377 = vmatpush2.msra.mxu0 0.0
    %378 = vmatprep.subr.mxu0 0.0
    %379 = vmatpush2.msra.mxu0 0.0
    %380 = vmatprep.subr.mxu0 0.0
    %381 = vmatpush2.msra.mxu0 0.0
    %382 = vmatprep.subr.mxu0 0.0
    %383 = vmatpush2.msra.mxu0 0.0
    %384 = vmatprep.subr.mxu0 0.0
    %385 = vmatpush2.msra.mxu0 0.0
    %386 = vmatprep.subr.mxu0 0.0
    %387 = vmatpush2.msra.mxu0 0.0
    %388 = vmatprep.subr.mxu0 0.0
    %389 = vmatpush2.msra.mxu0 0.0
    %390 = vmatprep.subr.mxu0 0.0
    %391 = vmatpush2.msra.mxu0 0.0
    %392 = vmatprep.subr.mxu0 0.0
    %393 = vmatpush2.msra.mxu0 0.0
    %394 = vmatprep.subr.mxu0 0.0
    %395 = vmatpush2.msra.mxu0 0.0
    %396 = vmatprep.subr.mxu0 0.0
    %397 = vmatpush2.msra.mxu0 0.0
    %398 = vmatprep.mubr.f32.mxu0 0.0
    %399 = vmatmul.mubr.f32.gmra.mxu0 %v329
    %v400 = vpop.f32.mrf.mxu0
    %v401 = vadd.f32 %v326, %v400
    %v402 = vpop.f32.mrf.mxu0
    %403 = vdwg.mxu0
    %404 = vst [vmem:[#allocation3] sm:$0x7] %v320
    %405 = vst [vmem:[#allocation3 + $0x3] sm:$0x7] %v401
    // Predicated region
    $region46: #{tpu_custom_call.1} parent=1 // pred_check
      _
    $region47: #{tpu_custom_call.1} parent=1 // pred_check_branch
      %407 = sbr.rel (0) target = $region49
    $region48: #{tpu_custom_call.1} parent=1 // pred_region
      %s409 = ssub.s32 128, 128
      %410 = vsyncadd [#allocation4], %s409
      %s412 = sshll.u32 [#allocation3], 4
      %s413 = int_to_ptr.vmem [resolvable:$true] %s412
      %415 = dma.vmem_to_hbm [thread:$0]  %s413, 128, %s11, [#allocation4]
    $region49: #{tpu_custom_call.1} parent=1 // pred_fallthru
      _
    // Predicated region
    $region50: #{tpu_custom_call.1} parent=1 // pred_check
      _
    $region51: #{tpu_custom_call.1} parent=1 // pred_check_branch
      %417 = sbr.rel (0) target = $region53
    $region52: #{tpu_custom_call.1} parent=1 // pred_region
      %418 = dma.done [#allocation4], 128
    $region53: #{tpu_custom_call.1} parent=1 // pred_fallthru
      _
    %419 = vsyncpa [#allocation4], 1

</llo_original>
